<compile_context>
chip_gen: v5e
topology: v5e:2x2
jax: 0.10.0
libtpu: 0.0.40
codegen_flags: <defaults>
</compile_context>

<pallas_src>
import functools

import jax
import jax.numpy as jnp
from jax.experimental import pallas as pl
from jax.experimental.pallas import tpu as pltpu


def _gap_mean_kernel(x_ref, o_ref, acc_ref, *, inv_t, t_rem):
    k = pl.program_id(2)
    nk = pl.num_programs(2)

    @pl.when(k == 0)
    def _():
        acc_ref[...] = jnp.zeros_like(acc_ref)

    if t_rem == 0:
        # T divides the tile: every block is fully valid.
        acc_ref[...] += jnp.sum(x_ref[...].astype(jnp.float32), axis=1)
    else:
        # Ragged last T tile: mask undefined rows before accumulating.
        @pl.when(k < nk - 1)
        def _():
            acc_ref[...] += jnp.sum(x_ref[...].astype(jnp.float32), axis=1)

        @pl.when(k == nk - 1)
        def _():
            x = x_ref[...].astype(jnp.float32)
            row = jax.lax.broadcasted_iota(jnp.int32, x.shape, 1)
            x = jnp.where(row < t_rem, x, 0.0)
            acc_ref[...] += jnp.sum(x, axis=1)

    @pl.when(k == nk - 1)
    def _():
        # Multiply by the true 1/T (compile-time constant).
        o_ref[...] = (acc_ref[...] * inv_t).astype(o_ref.dtype)


def _gap_masked_kernel(x_ref, m_ref, o_ref, acc_ref, den_ref, *, t_rem):
    k = pl.program_id(2)
    nk = pl.num_programs(2)

    @pl.when(k == 0)
    def _():
        acc_ref[...] = jnp.zeros_like(acc_ref)
        den_ref[...] = jnp.zeros_like(den_ref)

    def accumulate(x, w):
        # mask is exactly 0/1 -> product in the input dtype is exact; cast
        # once for the f32 accumulate (smaller in-kernel temporary).
        wx = w.astype(x.dtype) * x                          # (bB, tT, tD)
        acc_ref[...] += jnp.sum(wx.astype(jnp.float32), axis=1)   # (bB, tD)
        den_ref[...] += jnp.sum(w.astype(jnp.float32), axis=1)    # (bB, 1)

    if t_rem == 0:
        accumulate(x_ref[...], m_ref[...])
    else:
        @pl.when(k < nk - 1)
        def _():
            accumulate(x_ref[...], m_ref[...])

        @pl.when(k == nk - 1)
        def _():
            x = x_ref[...]
            w = m_ref[...]
            rowx = jax.lax.broadcasted_iota(jnp.int32, x.shape, 1)
            roww = jax.lax.broadcasted_iota(jnp.int32, w.shape, 1)
            x = jnp.where(rowx < t_rem, x, jnp.zeros_like(x))
            w = jnp.where(roww < t_rem, w, jnp.zeros_like(w))
            accumulate(x, w)

    @pl.when(k == nk - 1)
    def _():
        den = den_ref[...]
        # EUP approx reciprocal + one Newton-Raphson refinement (no VPU divide).
        # NOTE: like the PyTorch reference, an all-zero mask row yields inf/nan.
        inv = pl.reciprocal(den, approx=True)
        inv = inv * (2.0 - den * inv)
        o_ref[...] = (acc_ref[...] * inv).astype(o_ref.dtype)


def gap(x, m, mask=True, *, d_tile=512, b_tile=8, x_block_bytes=4 * 1024 * 1024):
    """Pallas implementation of GAP.forward(x, m). x: (B,T,D), m: (B,T)."""
    B, T, D = x.shape
    out_dtype = x.dtype

    # --- tile selection (no wrapper padding; ragged edges handled in-kernel) ---
    # B tile: fixed small multiple of 8 (or full B when B < 8); cdiv grid.
    bB = b_tile if B >= b_tile else B
    grid_b = pl.cdiv(B, bB)

    # D tile: full D when it fits, else a 128-multiple; cdiv grid (ragged last
    # D block only produces garbage in columns that are sliced off by the
    # masked output write).
    tD = D if D <= d_tile else d_tile
    # v7x megacore: if the parallel (B, D) grid collapses to a single tile,
    # split D across two lane-aligned tiles so both TensorCores stream.
    if grid_b * pl.cdiv(D, tD) == 1 and D >= 256:
        tD = ((pl.cdiv(D, 2) + 127) // 128) * 128
    grid_d = pl.cdiv(D, tD)

    # T tile: largest multiple of 8 keeping the x block under ~4 MiB
    # (2 buffers + f32 temps stay well under the 32 MiB scoped VMEM on
    # v5e/v6e/v7x), capped at 1024; full T when it already fits.
    itemsize = jnp.dtype(x.dtype).itemsize
    tT_cap = max(8, (x_block_bytes // (bB * tD * itemsize)) // 8 * 8)
    tT_cap = min(tT_cap, 1024)
    tT = T if T <= tT_cap else tT_cap
    grid_t = pl.cdiv(T, tT)
    t_rem = T % tT  # != 0 only when grid_t >= 2 -> in-kernel ragged-T masking

    grid = (grid_b, grid_d, grid_t)

    compiler_params = pltpu.CompilerParams(
        dimension_semantics=("parallel", "parallel", "arbitrary"),
        vmem_limit_bytes=32 * 1024 * 1024,  # explicit: v5e scoped default is 16 MiB
    )

    x_spec = pl.BlockSpec((bB, tT, tD), lambda b, d, k: (b, k, d))
    o_spec = pl.BlockSpec((bB, tD), lambda b, d, k: (b, d))

    if mask:
        kernel = functools.partial(_gap_mean_kernel, inv_t=1.0 / float(T), t_rem=t_rem)
        out = pl.pallas_call(
            kernel,
            out_shape=jax.ShapeDtypeStruct((B, D), out_dtype),
            grid=grid,
            in_specs=[x_spec],
            out_specs=o_spec,
            scratch_shapes=[pltpu.VMEM((bB, tD), jnp.float32)],
            compiler_params=compiler_params,
        )(x)
    else:
        # Mask fed as (B, T, 1): the broadcast against x is a sublane-aligned
        # VPU multiply (no cross-lane relayout).
        m3 = m.reshape(B, T, 1)
        kernel = functools.partial(_gap_masked_kernel, t_rem=t_rem)
        out = pl.pallas_call(
            kernel,
            out_shape=jax.ShapeDtypeStruct((B, D), out_dtype),
            grid=grid,
            in_specs=[
                x_spec,
                pl.BlockSpec((bB, tT, 1), lambda b, d, k: (b, k, 0)),
            ],
            out_specs=o_spec,
            scratch_shapes=[
                pltpu.VMEM((bB, tD), jnp.float32),
                pltpu.VMEM((bB, 1), jnp.float32),
            ],
            compiler_params=compiler_params,
        )(x, m3)

    return out


if __name__ == "__main__":
    key = jax.random.PRNGKey(0)
    kx, km = jax.random.split(key)

    # Small shapes consistent with the module: batch=2, seq=8, hidden=32.
    B, T, D = 2, 8, 32
    x = jax.random.normal(kx, (B, T, D), dtype=jnp.float32)
    m = (jax.random.uniform(km, (B, T)) > 0.3).astype(jnp.float32)
    m = m.at[:, 0].set(1.0)  # at least one active token per row

    # mask=True branch (module default): plain mean over dim=1.
    out_mean = jax.block_until_ready(gap(x, m, mask=True))
    ref_mean = jnp.mean(x, axis=1)
    assert out_mean.shape == (B, D)
    assert jnp.allclose(out_mean, ref_mean, atol=1e-5, rtol=1e-5)

    # mask=False branch: masked average over dim=1.
    out_masked = jax.block_until_ready(gap(x, m, mask=False))
    ref_masked = jnp.einsum("bt,btd->bd", m, x) / jnp.sum(m, axis=1, keepdims=True)
    assert out_masked.shape == (B, D)
    assert jnp.allclose(out_masked, ref_masked, atol=1e-4, rtol=1e-4)

    # Larger, non-divisible shape exercising the ragged-tile streaming path
    # (T and D span multiple tiles with remainders; bf16 input, f32 accum).
    B2, T2, D2 = 8, 1030, 640
    x2 = jax.random.normal(kx, (B2, T2, D2), dtype=jnp.bfloat16)
    m2 = (jax.random.uniform(km, (B2, T2)) > 0.5).astype(jnp.float32)
    m2 = m2.at[:, 0].set(1.0)

    out2_mean = jax.block_until_ready(gap(x2, m2, mask=True))
    ref2_mean = jnp.mean(x2.astype(jnp.float32), axis=1)
    assert out2_mean.shape == (B2, D2)
    assert jnp.allclose(out2_mean.astype(jnp.float32), ref2_mean, atol=1e-2, rtol=1e-2)

    out2_masked = jax.block_until_ready(gap(x2, m2, mask=False))
    ref2_masked = (jnp.einsum("bt,btd->bd", m2, x2.astype(jnp.float32))
                   / jnp.sum(m2, axis=1, keepdims=True))
    assert out2_masked.shape == (B2, D2)
    assert jnp.allclose(out2_masked.astype(jnp.float32), ref2_masked, atol=1e-2, rtol=1e-2)

    # Odd batch size (not a multiple of 8) exercising the ragged-B path.
    B3, T3, D3 = 10, 100, 160
    x3 = jax.random.normal(kx, (B3, T3, D3), dtype=jnp.float32)
    m3 = (jax.random.uniform(km, (B3, T3)) > 0.5).astype(jnp.float32)
    m3 = m3.at[:, 0].set(1.0)
    out3 = jax.block_until_ready(gap(x3, m3, mask=False))
    ref3 = jnp.einsum("bt,btd->bd", m3, x3) / jnp.sum(m3, axis=1, keepdims=True)
    assert out3.shape == (B3, D3)
    assert jnp.allclose(out3, ref3, atol=1e-4, rtol=1e-4)

    print("KERNEL_OK")
</pallas_src>

<mosaic_0001>
module attributes {stable_mosaic.version = 11 : i64} {
  func.func @_gap_mean_kernel(%arg0: i32, %arg1: i32, %arg2: i32, %arg3: memref<2x8x32xf32, #tpu.memory_space<vmem>>, %arg4: memref<2x32xf32, #tpu.memory_space<vmem>>, %arg5: memref<2x32xf32, #tpu.memory_space<vmem>>) attributes {dimension_semantics = [#tpu.dimension_semantics<parallel>, #tpu.dimension_semantics<parallel>, #tpu.dimension_semantics<arbitrary>], iteration_bounds = array<i64: 1, 1, 1>, scalar_prefetch = 0 : i64, scratch_operands = 1 : i64, tpu.core_type = #tpu.core_type<tc>, window_params = [{transform_indices = @transform_0, window_bounds = array<i64: 2, 8, 32>}, {transform_indices = @transform_1, window_bounds = array<i64: 2, 32>}]} {
    %c0_i32 = arith.constant 0 : i32
    %0 = arith.cmpi eq, %arg2, %c0_i32 : i32
    %1 = arith.extui %0 : i1 to i32
    %c0_i32_0 = arith.constant 0 : i32
    %2 = arith.cmpi ne, %1, %c0_i32_0 : i32
    scf.if %2 {
      %cst_9 = arith.constant 0.000000e+00 : f32
      %11 = vector.broadcast %cst_9 : f32 to vector<2x32xf32>
      %c0_10 = arith.constant 0 : index
      %c0_11 = arith.constant 0 : index
      %12 = vector.load %arg5[%c0_10, %c0_11] : memref<2x32xf32, #tpu.memory_space<vmem>>, vector<2x32xf32>
      tpu.vector_store %arg5[%c0_10, %c0_11], %11 {strides = array<i32>} : memref<2x32xf32, #tpu.memory_space<vmem>>, vector<2x32xf32>,
    } else {
    }
    %c0 = arith.constant 0 : index
    %c0_1 = arith.constant 0 : index
    %3 = vector.load %arg5[%c0, %c0_1] : memref<2x32xf32, #tpu.memory_space<vmem>>, vector<2x32xf32>
    %c0_2 = arith.constant 0 : index
    %c0_3 = arith.constant 0 : index
    %c0_4 = arith.constant 0 : index
    %4 = vector.load %arg3[%c0_2, %c0_3, %c0_4] : memref<2x8x32xf32, #tpu.memory_space<vmem>>, vector<2x8x32xf32>
    %cst = arith.constant dense<0.000000e+00> : vector<2x32xf32>
    %5 = vector.multi_reduction <add>, %4, %cst [1] : vector<2x8x32xf32> to vector<2x32xf32>
    %6 = arith.addf %3, %5 : vector<2x32xf32>
    %c0_5 = arith.constant 0 : index
    %c0_6 = arith.constant 0 : index
    %7 = vector.load %arg5[%c0_5, %c0_6] : memref<2x32xf32, #tpu.memory_space<vmem>>, vector<2x32xf32>
    tpu.vector_store %arg5[%c0_5, %c0_6], %6 {strides = array<i32>} : memref<2x32xf32, #tpu.memory_space<vmem>>, vector<2x32xf32>,
    %c0_i32_7 = arith.constant 0 : i32
    %8 = arith.cmpi eq, %arg2, %c0_i32_7 : i32
    %9 = arith.extui %8 : i1 to i32
    %c0_i32_8 = arith.constant 0 : i32
    %10 = arith.cmpi ne, %9, %c0_i32_8 : i32
    scf.if %10 {
      %c0_9 = arith.constant 0 : index
      %c0_10 = arith.constant 0 : index
      %11 = vector.load %arg5[%c0_9, %c0_10] : memref<2x32xf32, #tpu.memory_space<vmem>>, vector<2x32xf32>
      %cst_11 = arith.constant 1.250000e-01 : f32
      %12 = vector.broadcast %cst_11 : f32 to vector<2x32xf32>
      %13 = arith.mulf %11, %12 : vector<2x32xf32>
      %c0_12 = arith.constant 0 : index
      %c0_13 = arith.constant 0 : index
      %14 = vector.load %arg4[%c0_12, %c0_13] : memref<2x32xf32, #tpu.memory_space<vmem>>, vector<2x32xf32>
      tpu.vector_store %arg4[%c0_12, %c0_13], %13 {strides = array<i32>} : memref<2x32xf32, #tpu.memory_space<vmem>>, vector<2x32xf32>,
    } else {
    }
    return
  }
  func.func @transform_0(%arg0: i32, %arg1: i32, %arg2: i32) -> (i32, i32, i32) {
    %c0_i32 = arith.constant 0 : i32
    return %arg0, %arg2, %arg1 : i32, i32, i32
  }
  func.func @transform_1(%arg0: i32, %arg1: i32, %arg2: i32) -> (i32, i32) {
    %c0_i32 = arith.constant 0 : i32
    return %arg0, %arg1 : i32, i32
  }
}

</mosaic_0001>

<llo_original>
// kernel: tpu_custom_call.1
$region0: #{tpu_custom_call.1}
  #allocation0 [shape = 'u32[]', space=smem, size = 0x4, offset = 0x4, fixed_abs, tag = 'smem constant byte address 0x4 - core index']
  #allocation1 [shape = 'u32[72,128]{1,0:T(1,128)}', space=vmem, size = 0x9000, scoped, tag = 'internal scratch']
  #allocation2 [shape = 'f32[2,32]{1,0:T(2,128)}', space=vmem, size = 0x400, scoped, tag = 'scratch operand']
  %s0 = inlined_call_operand.hbm [shape: f32[2,8,32], index: 0, kind: input, shape index: {}]
  %s1 = inlined_call_operand.hbm [shape: f32[2,32], index: 1, kind: output, shape index: {}]
  %s2 = sld [smem:[#allocation0]]
  $region26: #{tpu_custom_call.1} parent=0
    _
  %s4 = ssub.s32 1, %s2
  %s5 = scalar_select 0, %s4, %s2
  $region1: #{tpu_custom_call.1} parent=0
    #allocation3 [shape = 'u8[8192]{0}', space=vmem, size = 0x2000, scoped, tag = 'input window, operand 0, single buffered']
    #allocation4 [shape = 's32[1]{0}', space=sflag, size = 0x4, scoped, tag = 'scoped memory for tpu_custom_call.1']
    #allocation5 [shape = 's32[1]{0}', space=sflag, size = 0x4, scoped, tag = 'scoped memory for tpu_custom_call.1']
    #allocation6 [shape = 'u8[1024]{0}', space=vmem, size = 0x400, scoped, tag = 'output window, operand 0, single buffered']
    %6 = vsyncpa [#allocation4], 0
    %7 = vsyncpa [#allocation5], 0
    // Predicated region
    $region2: #{tpu_custom_call.1} parent=1 // pred_check
      _
    $region3: #{tpu_custom_call.1} parent=1 // pred_check_branch
      %9 = sbr.rel (0) target = $region5
    $region4: #{tpu_custom_call.1} parent=1 // pred_region
      %11 = vsyncadd [#allocation4], 0
      %s12 = sshll.u32 %s0, 4
      %s13 = int_to_ptr.hbm [resolvable:$true] %s12
      %s14 = sshll.u32 [#allocation3], 4
      %s15 = int_to_ptr.vmem [resolvable:$true] %s14
      %20 = dma.hbm_to_vmem [thread:$0]  %s13, 256, %s15, [#allocation4], 128, 128, 8
    $region5: #{tpu_custom_call.1} parent=1 // pred_fallthru
      _
    // Predicated region
    $region6: #{tpu_custom_call.1} parent=1 // pred_check
      _
    $region7: #{tpu_custom_call.1} parent=1 // pred_check_branch
      %22 = sbr.rel (0) target = $region9
    $region8: #{tpu_custom_call.1} parent=1 // pred_region
      %24 = dma.done [#allocation4], 256
    $region9: #{tpu_custom_call.1} parent=1 // pred_fallthru
      _
    %p25 = scmp.eq.s32.totalorder 0, 0
    // Predicated region
    $region10: #{tpu_custom_call.1} parent=1 // pred_check
      %p26 = pneg %p25
    $region11: #{tpu_custom_call.1} parent=1 // pred_check_branch
      %28 = sbr.rel (%p26) target = $region13
    $region12: #{tpu_custom_call.1} parent=1 // pred_region
      %vm29 = vcmask 254976
      %30 = vst.msk [vmem:[#allocation2] sm:$0x3] %vm29, 0.0
    $region13: #{tpu_custom_call.1} parent=1 // pred_fallthru
      _
    %v31 = vld [vmem:[#allocation2] sm:$0x3]
    %v32 = vld [vmem:[#allocation3] sm:$0xff]
    %v33 = vld [vmem:[#allocation3 + $0x8] sm:$0xff]
    %vm34 = vcmask 261120
    %v35 = vsel %vm34, %v32, 0.0
    %v36 = vrot.slane %v35, 4
    %v37 = vadd.f32 %v35, %v36
    %v38 = vrot.slane %v37, 2
    %v39 = vadd.f32 %v37, %v38
    %v40 = vrot.slane %v39, 1
    %v41 = vadd.f32 %v39, %v40
    %v42 = vsel %vm34, %v33, 0.0
    %v43 = vrot.slane %v42, 4
    %v44 = vadd.f32 %v42, %v43
    %v45 = vrot.slane %v44, 2
    %v46 = vadd.f32 %v44, %v45
    %v47 = vrot.slane %v46, 1
    %v48 = vadd.f32 %v46, %v47
    %vm51 = vcmask 1041409
    %v52 = vsel %vm51, %v48, %v41
    %v54 = vadd.f32 %v31, %v52
    %vm55 = vcmask 254976
    %56 = vst.msk [vmem:[#allocation2] sm:$0x3] %vm55, %v54
    // Predicated region
    $region14: #{tpu_custom_call.1} parent=1 // pred_check
      %p57 = pneg %p25
    $region15: #{tpu_custom_call.1} parent=1 // pred_check_branch
      %59 = sbr.rel (%p57) target = $region17
    $region16: #{tpu_custom_call.1} parent=1 // pred_region
      %v60 = vld [vmem:[#allocation2] sm:$0x3]
      %v61 = vmul.f32 %v60, 0.125
      %62 = vst.msk [vmem:[#allocation6] sm:$0x3] %vm55, %v61
    $region17: #{tpu_custom_call.1} parent=1 // pred_fallthru
      _
    // Predicated region
    $region18: #{tpu_custom_call.1} parent=1 // pred_check
      _
    $region19: #{tpu_custom_call.1} parent=1 // pred_check_branch
      %64 = sbr.rel (0) target = $region21
    $region20: #{tpu_custom_call.1} parent=1 // pred_region
      %66 = vsyncadd [#allocation5], 0
      %s68 = sshll.u32 [#allocation6], 4
      %s69 = int_to_ptr.vmem [resolvable:$true] %s68
      %s70 = sshll.u32 %s1, 4
      %s71 = int_to_ptr.hbm [resolvable:$true] %s70
      %73 = dma.vmem_to_hbm [thread:$0]  %s69, 32, %s71, [#allocation5]
    $region21: #{tpu_custom_call.1} parent=1 // pred_fallthru
      _
    // Predicated region
    $region22: #{tpu_custom_call.1} parent=1 // pred_check
      _
    $region23: #{tpu_custom_call.1} parent=1 // pred_check_branch
      %75 = sbr.rel (0) target = $region25
    $region24: #{tpu_custom_call.1} parent=1 // pred_region
      %77 = dma.done [#allocation5], 32
    $region25: #{tpu_custom_call.1} parent=1 // pred_fallthru
      _
    %78 = vsyncpa [#allocation4], 1
    %79 = vsyncpa [#allocation5], 1

</llo_original>
